<compile_context>
chip_gen: v6e
topology: v6e:2x2x1
jax: 0.10.0
libtpu: 0.0.40
codegen_flags: <defaults>
</compile_context>

<pallas_src>
import jax
import jax.numpy as jnp
from jax import lax
from jax.experimental import pallas as pl
from jax.experimental.pallas import tpu as pltpu

INPUT_SIZE = 18
HIDDEN = 48
OUTPUT_SIZE = 1


def _round_up(n, m):
    return ((n + m - 1) // m) * m


def _mlp_kernel(x_ref, w1_ref, b1_ref, w2_ref, b2_ref, o_ref):
    # x:  [tb, 18] (natural layout, batch on sublanes)
    # w1: [48, 18]   b1: [48, 1]
    # w2: [1, 48]    b2: SMEM (1,)   o: [1, tb]
    x = x_ref[...]
    # h = W1 @ x.T  -> [48, tb]; batch rides the lane axis so both matmuls
    # have a wide lane-dense N.  The operand relayout lands on the XLU slot,
    # which has slack in this kernel.
    h = lax.dot_general(
        w1_ref[...], x,
        dimension_numbers=(((1,), (1,)), ((), ())),
        preferred_element_type=jnp.float32,
    ) + b1_ref[...]
    h = jnp.maximum(h, 0.0)                                      # ReLU
    y = jnp.dot(w2_ref[...], h, preferred_element_type=jnp.float32) + b2_ref[0]
    o_ref[...] = jax.nn.sigmoid(y)                               # torch.sigmoid


def mancala_bot_forward(x, w1, b1, w2, b2, *, block_b=8192):
    """Forward pass of MancalaBotModel.

    x:  [B, 18] float32 board / player / move features (natural layout).
    w1: [48, 18], b1: [48]   (PyTorch nn.Linear layout: [out, in]).
    w2: [1, 48],  b2: [1].
    Returns [B, 1] move ratings in (0, 1).
    """
    B = x.shape[0]
    bp = _round_up(B, 128)
    # Big lane tiles amortize per-grid-step overhead; cap at half the padded
    # batch so large batches keep >= 2 parallel grid steps (both TCs on v7x).
    tb = max(128, min(block_b, _round_up(pl.cdiv(bp, 2), 128)))
    grid = pl.cdiv(B, tb)

    flops = 2 * B * (INPUT_SIZE * HIDDEN + HIDDEN * OUTPUT_SIZE)
    bytes_accessed = 4 * (
        B * (INPUT_SIZE + OUTPUT_SIZE)
        + HIDDEN * INPUT_SIZE + HIDDEN
        + OUTPUT_SIZE * HIDDEN + OUTPUT_SIZE
    )

    out_t = pl.pallas_call(
        _mlp_kernel,
        out_shape=jax.ShapeDtypeStruct((OUTPUT_SIZE, B), jnp.float32),
        grid=(grid,),
        in_specs=[
            pl.BlockSpec((tb, INPUT_SIZE), lambda i: (i, 0)),        # x batch tile
            pl.BlockSpec((HIDDEN, INPUT_SIZE), lambda i: (0, 0)),    # W1 (resident)
            pl.BlockSpec((HIDDEN, 1), lambda i: (0, 0)),             # b1 (resident)
            pl.BlockSpec((OUTPUT_SIZE, HIDDEN), lambda i: (0, 0)),   # W2 (resident)
            pl.BlockSpec(memory_space=pltpu.MemorySpace.SMEM),       # b2 scalar
        ],
        out_specs=pl.BlockSpec((OUTPUT_SIZE, tb), lambda i: (0, i)),
        compiler_params=pltpu.CompilerParams(
            dimension_semantics=("parallel",)),
        cost_estimate=pl.CostEstimate(
            flops=flops, transcendentals=B, bytes_accessed=bytes_accessed),
    )(x, w1, b1.reshape(HIDDEN, 1), w2, b2.reshape(OUTPUT_SIZE))
    # (1, B) -> (B, 1) is a pure reshape (identical linear order), no transpose.
    return out_t.reshape(B, OUTPUT_SIZE)


def init_params(key):
    """Deterministic init mimicking nn.Linear's U(-1/sqrt(fan_in), 1/sqrt(fan_in))."""
    k1, k2, k3, k4 = jax.random.split(key, 4)
    bound1 = 1.0 / jnp.sqrt(jnp.float32(INPUT_SIZE))
    bound2 = 1.0 / jnp.sqrt(jnp.float32(HIDDEN))
    # PyTorch nn.Linear layout: weight [out, in], bias [out].
    w1 = jax.random.uniform(k1, (HIDDEN, INPUT_SIZE), jnp.float32, -bound1, bound1)
    b1 = jax.random.uniform(k2, (HIDDEN,), jnp.float32, -bound1, bound1)
    w2 = jax.random.uniform(k3, (OUTPUT_SIZE, HIDDEN), jnp.float32, -bound2, bound2)
    b2 = jax.random.uniform(k4, (OUTPUT_SIZE,), jnp.float32, -bound2, bound2)
    return w1, b1, w2, b2


def reference_forward(x, w1, b1, w2, b2):
    h = jnp.maximum(x @ w1.T + b1, 0.0)
    return jax.nn.sigmoid(h @ w2.T + b2)


if __name__ == "__main__":
    key = jax.random.PRNGKey(0)
    kx, kp = jax.random.split(key)
    w1, b1, w2, b2 = init_params(kp)

    # Small production-like batch (8 candidate moves) plus a multi-block
    # ragged batch (384 = 1.5 x 256-lane tiles) to exercise the grid, the
    # partial-tile read path and the masked partial output store.
    for batch in (8, 384):
        x = jax.random.uniform(kx, (batch, INPUT_SIZE), jnp.float32, 0.0, 6.0)
        out = jax.block_until_ready(mancala_bot_forward(x, w1, b1, w2, b2))
        ref = reference_forward(x, w1, b1, w2, b2)
        assert out.shape == (batch, OUTPUT_SIZE)
        assert jnp.allclose(out, ref, atol=1e-5, rtol=1e-5), "mismatch vs. JAX reference"

    print("KERNEL_OK")
</pallas_src>

<mosaic_0001>
module attributes {stable_mosaic.version = 11 : i64} {
  func.func @_mlp_kernel(%arg0: i32, %arg1: memref<128x18xf32, #tpu.memory_space<vmem>>, %arg2: memref<48x18xf32, #tpu.memory_space<vmem>>, %arg3: memref<48x1xf32, #tpu.memory_space<vmem>>, %arg4: memref<1x48xf32, #tpu.memory_space<vmem>>, %arg5: memref<1xf32, #tpu.memory_space<smem>>, %arg6: memref<1x128xf32, #tpu.memory_space<vmem>>) attributes {dimension_semantics = [#tpu.dimension_semantics<parallel>], iteration_bounds = array<i64: 1>, scalar_prefetch = 0 : i64, scratch_operands = 0 : i64, tpu.core_type = #tpu.core_type<tc>, window_params = [{transform_indices = @transform_0, window_bounds = array<i64: 128, 18>}, {pipeline_mode = #tpu.pipeline_mode<synchronous>, transform_indices = @transform_1, window_bounds = array<i64: 48, 18>}, {pipeline_mode = #tpu.pipeline_mode<synchronous>, transform_indices = @transform_2, window_bounds = array<i64: 48, 1>}, {pipeline_mode = #tpu.pipeline_mode<synchronous>, transform_indices = @transform_3, window_bounds = array<i64: 1, 48>}, {transform_indices = @transform_4, window_bounds = array<i64: 1>}, {transform_indices = @transform_5, window_bounds = array<i64: 1, 128>}]} {
    %c0 = arith.constant 0 : index
    %c0_0 = arith.constant 0 : index
    %0 = vector.load %arg1[%c0, %c0_0] : memref<128x18xf32, #tpu.memory_space<vmem>>, vector<128x18xf32>
    %c0_1 = arith.constant 0 : index
    %c0_2 = arith.constant 0 : index
    %1 = vector.load %arg2[%c0_1, %c0_2] : memref<48x18xf32, #tpu.memory_space<vmem>>, vector<48x18xf32>
    %cst = arith.constant dense<0.000000e+00> : vector<48x128xf32>
    %2 = tpu.matmul %1, %0, %cst {dimension_numbers = #tpu.dot_dimension_numbers<[1], [1], [0], [0], [0, 0, 1, 0], [], []>} : vector<48x18xf32>, vector<128x18xf32>, vector<48x128xf32> -> vector<48x128xf32>
    %c0_3 = arith.constant 0 : index
    %c0_4 = arith.constant 0 : index
    %3 = vector.load %arg3[%c0_3, %c0_4] : memref<48x1xf32, #tpu.memory_space<vmem>>, vector<48x1xf32>
    %4 = vector.broadcast %3 : vector<48x1xf32> to vector<48x128xf32>
    %5 = arith.addf %2, %4 : vector<48x128xf32>
    %cst_5 = arith.constant 0.000000e+00 : f32
    %6 = vector.broadcast %cst_5 : f32 to vector<48x128xf32>
    %7 = arith.maximumf %5, %6 : vector<48x128xf32>
    %c0_6 = arith.constant 0 : index
    %c0_7 = arith.constant 0 : index
    %8 = vector.load %arg4[%c0_6, %c0_7] : memref<1x48xf32, #tpu.memory_space<vmem>>, vector<1x48xf32>
    %cst_8 = arith.constant dense<0.000000e+00> : vector<1x128xf32>
    %9 = tpu.matmul %8, %7, %cst_8 {dimension_numbers = #tpu.dot_dimension_numbers<[1], [0], [0], [1], [0, 0, 1, 1], [], []>} : vector<1x48xf32>, vector<48x128xf32>, vector<1x128xf32> -> vector<1x128xf32>
    %c0_9 = arith.constant 0 : index
    %10 = memref.load %arg5[%c0_9] : memref<1xf32, #tpu.memory_space<smem>>
    %11 = vector.broadcast %10 : f32 to vector<1x128xf32>
    %12 = arith.addf %9, %11 : vector<1x128xf32>
    %13 = arith.negf %12 : vector<1x128xf32>
    %14 = math.exp %13 : vector<1x128xf32>
    %cst_10 = arith.constant 1.000000e+00 : f32
    %15 = vector.broadcast %cst_10 : f32 to vector<1x128xf32>
    %16 = arith.addf %15, %14 : vector<1x128xf32>
    %17 = arith.divf %15, %16 : vector<1x128xf32>
    %c0_11 = arith.constant 0 : index
    %c0_12 = arith.constant 0 : index
    %18 = vector.load %arg6[%c0_11, %c0_12] : memref<1x128xf32, #tpu.memory_space<vmem>>, vector<1x128xf32>
    tpu.vector_store %arg6[%c0_11, %c0_12], %17 {strides = array<i32>} : memref<1x128xf32, #tpu.memory_space<vmem>>, vector<1x128xf32>,
    return
  }
  func.func @transform_0(%arg0: i32) -> (i32, i32) {
    %c0_i32 = arith.constant 0 : i32
    %c0_i32_0 = arith.constant 0 : i32
    return %arg0, %c0_i32 : i32, i32
  }
  func.func @transform_1(%arg0: i32) -> (i32, i32) {
    %c0_i32 = arith.constant 0 : i32
    %c0_i32_0 = arith.constant 0 : i32
    %c0_i32_1 = arith.constant 0 : i32
    return %c0_i32, %c0_i32_0 : i32, i32
  }
  func.func @transform_2(%arg0: i32) -> (i32, i32) {
    %c0_i32 = arith.constant 0 : i32
    %c0_i32_0 = arith.constant 0 : i32
    %c0_i32_1 = arith.constant 0 : i32
    return %c0_i32, %c0_i32_0 : i32, i32
  }
  func.func @transform_3(%arg0: i32) -> (i32, i32) {
    %c0_i32 = arith.constant 0 : i32
    %c0_i32_0 = arith.constant 0 : i32
    %c0_i32_1 = arith.constant 0 : i32
    return %c0_i32, %c0_i32_0 : i32, i32
  }
  func.func @transform_4(%arg0: i32) -> i32 {
    %c0_i32 = arith.constant 0 : i32
    %c0_i32_0 = arith.constant 0 : i32
    return %c0_i32 : i32
  }
  func.func @transform_5(%arg0: i32) -> (i32, i32) {
    %c0_i32 = arith.constant 0 : i32
    %c0_i32_0 = arith.constant 0 : i32
    return %c0_i32, %arg0 : i32, i32
  }
}

</mosaic_0001>

<llo_original>
// kernel: tpu_custom_call.1
$region0: #{tpu_custom_call.1}
  #allocation0 [shape = 'u32[]', space=smem, size = 0x4, offset = 0x4, fixed_abs, tag = 'smem constant byte address 0x4 - core index']
  #allocation1 [shape = 'u32[144,128]{1,0:T(1,128)}', space=vmem, size = 0x12000, scoped, tag = 'internal scratch']
  #allocation2 [shape = 'f32[1]{0:T(128)S(6)}', space=smem, size = 0x200, scoped, tag = 'scoped memory for tpu_custom_call.1']
  %s0 = inlined_call_operand.vmem [shape: f32[8,18], index: 0, kind: input, shape index: {}]
  %s1 = inlined_call_operand.vmem [shape: f32[48,18], index: 1, kind: input, shape index: {}]
  %s2 = inlined_call_operand.vmem [shape: f32[48,1], index: 2, kind: input, shape index: {}]
  %s3 = inlined_call_operand.vmem [shape: f32[1,48], index: 3, kind: input, shape index: {}]
  %s4 = inlined_call_operand.<no memory space> [shape: f32[1], index: 4, kind: input, shape index: {}]
  %s5 = inlined_call_operand.hbm [shape: f32[1,8], index: 5, kind: output, shape index: {}]
  %s6 = sld [smem:[#allocation0]]
  $region30: #{tpu_custom_call.1} parent=0
    _
  %s8 = ssub.s32 1, %s6
  %s9 = scalar_select 0, %s8, %s6
  %10 = sst [smem:[#allocation2]] %s4
  $region1: #{tpu_custom_call.1} parent=0
    #allocation3 [shape = 'u8[512]{0}', space=vmem, size = 0x400, scoped, tag = 'output window, operand 0, single buffered']
    #allocation4 [shape = 's32[1]{0}', space=sflag, size = 0x4, scoped, tag = 'scoped memory for tpu_custom_call.1']
    %11 = vsyncpa [#allocation4], 0
    // Predicated region
    $region2: #{tpu_custom_call.1} parent=1 // pred_check
      _
    $region3: #{tpu_custom_call.1} parent=1 // pred_check_branch
      %13 = sbr.rel (0) target = $region5
    $region4: #{tpu_custom_call.1} parent=1 // pred_region
      _
    $region5: #{tpu_custom_call.1} parent=1 // pred_fallthru
      _
    // Predicated region
    $region6: #{tpu_custom_call.1} parent=1 // pred_check
      _
    $region7: #{tpu_custom_call.1} parent=1 // pred_check_branch
      %15 = sbr.rel (0) target = $region9
    $region8: #{tpu_custom_call.1} parent=1 // pred_region
      _
    $region9: #{tpu_custom_call.1} parent=1 // pred_fallthru
      _
    // Predicated region
    $region10: #{tpu_custom_call.1} parent=1 // pred_check
      _
    $region11: #{tpu_custom_call.1} parent=1 // pred_check_branch
      %17 = sbr.rel (0) target = $region13
    $region12: #{tpu_custom_call.1} parent=1 // pred_region
      _
    $region13: #{tpu_custom_call.1} parent=1 // pred_fallthru
      _
    // Predicated region
    $region14: #{tpu_custom_call.1} parent=1 // pred_check
      _
    $region15: #{tpu_custom_call.1} parent=1 // pred_check_branch
      %19 = sbr.rel (0) target = $region17
    $region16: #{tpu_custom_call.1} parent=1 // pred_region
      _
    $region17: #{tpu_custom_call.1} parent=1 // pred_fallthru
      _
    // Predicated region
    $region18: #{tpu_custom_call.1} parent=1 // pred_check
      _
    $region19: #{tpu_custom_call.1} parent=1 // pred_check_branch
      %21 = sbr.rel (0) target = $region21
    $region20: #{tpu_custom_call.1} parent=1 // pred_region
      _
    $region21: #{tpu_custom_call.1} parent=1 // pred_fallthru
      _
    %v22 = vld [vmem:[%s0] sm:$0xff]
    %v23 = vld [vmem:[%s0 + $0x8] sm:$0xff]
    %v24 = vld [vmem:[%s0 + $0x10] sm:$0xff]
    %v25 = vld [vmem:[%s0 + $0x18] sm:$0xff]
    %v26 = vld [vmem:[%s0 + $0x20] sm:$0xff]
    %v27 = vld [vmem:[%s0 + $0x28] sm:$0xff]
    %v28 = vld [vmem:[%s0 + $0x30] sm:$0xff]
    %v29 = vld [vmem:[%s0 + $0x38] sm:$0xff]
    %v30 = vld [vmem:[%s0 + $0x40] sm:$0xff]
    %v31 = vld [vmem:[%s0 + $0x48] sm:$0xff]
    %v32 = vld [vmem:[%s0 + $0x50] sm:$0xff]
    %v33 = vld [vmem:[%s0 + $0x58] sm:$0xff]
    %v34 = vld [vmem:[%s0 + $0x60] sm:$0xff]
    %v35 = vld [vmem:[%s0 + $0x68] sm:$0xff]
    %v36 = vld [vmem:[%s0 + $0x70] sm:$0xff]
    %v37 = vld [vmem:[%s0 + $0x78] sm:$0xff]
    %v38 = vld [vmem:[%s1] sm:$0xff]
    %v39 = vld [vmem:[%s1 + $0x8] sm:$0xff]
    %v40 = vld [vmem:[%s1 + $0x10] sm:$0xff]
    %v41 = vld [vmem:[%s1 + $0x18] sm:$0xff]
    %v42 = vld [vmem:[%s1 + $0x20] sm:$0xff]
    %v43 = vld [vmem:[%s1 + $0x28] sm:$0xff]
    %v44 = vld [vmem:[%s2] sm:$0xff]
    %v45 = vld [vmem:[%s2 + $0x8] sm:$0xff]
    %v46 = vld [vmem:[%s2 + $0x10] sm:$0xff]
    %v47 = vld [vmem:[%s2 + $0x18] sm:$0xff]
    %v48 = vld [vmem:[%s2 + $0x20] sm:$0xff]
    %v49 = vld [vmem:[%s2 + $0x28] sm:$0xff]
    %51 = vset.pattern.permute.xlu0 0
    %52 = vperm.xlu0 %51, %v44
    %v53 = vpop.permute.xlu0 %52
    %56 = vset.pattern.permute.xlu0 0
    %57 = vperm.xlu0 %56, %v45
    %v58 = vpop.permute.xlu0 %57
    %61 = vset.pattern.permute.xlu0 0
    %62 = vperm.xlu0 %61, %v46
    %v63 = vpop.permute.xlu0 %62
    %66 = vset.pattern.permute.xlu0 0
    %67 = vperm.xlu0 %66, %v47
    %v68 = vpop.permute.xlu0 %67
    %71 = vset.pattern.permute.xlu0 0
    %72 = vperm.xlu0 %71, %v48
    %v73 = vpop.permute.xlu0 %72
    %76 = vset.pattern.permute.xlu0 0
    %77 = vperm.xlu0 %76, %v49
    %v78 = vpop.permute.xlu0 %77
    %vm80 = vcmask 146432
    %v82 = vsel %vm80, %v38, 0
    %v85 = vsel %vm80, %v39, 0
    %v88 = vsel %vm80, %v40, 0
    %v91 = vsel %vm80, %v41, 0
    %v94 = vsel %vm80, %v42, 0
    %v97 = vsel %vm80, %v43, 0
    %v100 = vsel %vm80, %v22, 0
    %v103 = vsel %vm80, %v23, 0
    %v106 = vsel %vm80, %v24, 0
    %v109 = vsel %vm80, %v25, 0
    %v112 = vsel %vm80, %v26, 0
    %v115 = vsel %vm80, %v27, 0
    %v118 = vsel %vm80, %v28, 0
    %v121 = vsel %vm80, %v29, 0
    %v124 = vsel %vm80, %v30, 0
    %v127 = vsel %vm80, %v31, 0
    %v130 = vsel %vm80, %v32, 0
    %v133 = vsel %vm80, %v33, 0
    %v136 = vsel %vm80, %v34, 0
    %v139 = vsel %vm80, %v35, 0
    %v142 = vsel %vm80, %v36, 0
    %v145 = vsel %vm80, %v37, 0
    %147 = vmatprep.subr.mxu0 0.0
    %148 = vmatpush1.xpose.msra.mxu0 %v145
    %149 = vmatprep.subr.mxu0 0.0
    %150 = vmatpush1.xpose.msra.mxu0 %v142
    %151 = vmatprep.subr.mxu0 0.0
    %152 = vmatpush1.xpose.msra.mxu0 %v139
    %153 = vmatprep.subr.mxu0 0.0
    %154 = vmatpush1.xpose.msra.mxu0 %v136
    %155 = vmatprep.subr.mxu0 0.0
    %156 = vmatpush1.xpose.msra.mxu0 %v133
    %157 = vmatprep.subr.mxu0 0.0
    %158 = vmatpush1.xpose.msra.mxu0 %v130
    %159 = vmatprep.subr.mxu0 0.0
    %160 = vmatpush1.xpose.msra.mxu0 %v127
    %161 = vmatprep.subr.mxu0 0.0
    %162 = vmatpush1.xpose.msra.mxu0 %v124
    %163 = vmatprep.subr.mxu0 0.0
    %164 = vmatpush1.xpose.msra.mxu0 %v121
    %165 = vmatprep.subr.mxu0 0.0
    %166 = vmatpush1.xpose.msra.mxu0 %v118
    %167 = vmatprep.subr.mxu0 0.0
    %168 = vmatpush1.xpose.msra.mxu0 %v115
    %169 = vmatprep.subr.mxu0 0.0
    %170 = vmatpush1.xpose.msra.mxu0 %v112
    %171 = vmatprep.subr.mxu0 0.0
    %172 = vmatpush1.xpose.msra.mxu0 %v109
    %173 = vmatprep.subr.mxu0 0.0
    %174 = vmatpush1.xpose.msra.mxu0 %v106
    %175 = vmatprep.subr.mxu0 0.0
    %176 = vmatpush1.xpose.msra.mxu0 %v103
    %177 = vmatprep.subr.mxu0 0.0
    %178 = vmatpush1.xpose.msra.mxu0 %v100
    %179 = vmatprep.subr.mxu0 0.0
    %180 = vmatpush2.xpose.msra.mxu0 0.0
    %181 = vmatprep.subr.mxu0 0.0
    %182 = vmatpush2.xpose.msra.mxu0 0.0
    %183 = vmatprep.subr.mxu0 0.0
    %184 = vmatpush2.xpose.msra.mxu0 0.0
    %185 = vmatprep.subr.mxu0 0.0
    %186 = vmatpush2.xpose.msra.mxu0 0.0
    %187 = vmatprep.subr.mxu0 0.0
    %188 = vmatpush2.xpose.msra.mxu0 0.0
    %189 = vmatprep.subr.mxu0 0.0
    %190 = vmatpush2.xpose.msra.mxu0 0.0
    %191 = vmatprep.subr.mxu0 0.0
    %192 = vmatpush2.xpose.msra.mxu0 0.0
    %193 = vmatprep.subr.mxu0 0.0
    %194 = vmatpush2.xpose.msra.mxu0 0.0
    %195 = vmatprep.subr.mxu0 0.0
    %196 = vmatpush2.xpose.msra.mxu0 0.0
    %197 = vmatprep.subr.mxu0 0.0
    %198 = vmatpush2.xpose.msra.mxu0 0.0
    %199 = vmatprep.subr.mxu0 0.0
    %200 = vmatpush2.xpose.msra.mxu0 0.0
    %201 = vmatprep.subr.mxu0 0.0
    %202 = vmatpush2.xpose.msra.mxu0 0.0
    %203 = vmatprep.subr.mxu0 0.0
    %204 = vmatpush2.xpose.msra.mxu0 0.0
    %205 = vmatprep.subr.mxu0 0.0
    %206 = vmatpush2.xpose.msra.mxu0 0.0
    %207 = vmatprep.subr.mxu0 0.0
    %208 = vmatpush2.xpose.msra.mxu0 0.0
    %209 = vmatprep.subr.mxu0 0.0
    %210 = vmatpush2.xpose.msra.mxu0 0.0
    %211 = vmatprep.mubr.f32.mxu0 0.0
    %212 = vmatmul.mubr.f32.gmra.mxu0 %v82
    %v213 = vpop.f32.mrf.mxu0
    %v214 = vadd.f32 %v53, %v213
    %v215 = vpop.f32.mrf.mxu0
    %216 = vmatprep.mubr.f32.mxu0 0.0
    %217 = vmatmul.mubr.f32.gmra.mxu0 %v85
    %v218 = vpop.f32.mrf.mxu0
    %v219 = vadd.f32 %v58, %v218
    %v220 = vpop.f32.mrf.mxu0
    %221 = vmatprep.mubr.f32.mxu0 0.0
    %222 = vmatmul.mubr.f32.gmra.mxu0 %v88
    %v223 = vpop.f32.mrf.mxu0
    %v224 = vadd.f32 %v63, %v223
    %v225 = vpop.f32.mrf.mxu0
    %226 = vmatprep.mubr.f32.mxu0 0.0
    %227 = vmatmul.mubr.f32.gmra.mxu0 %v91
    %v228 = vpop.f32.mrf.mxu0
    %v229 = vadd.f32 %v68, %v228
    %v230 = vpop.f32.mrf.mxu0
    %231 = vmatprep.mubr.f32.mxu0 0.0
    %232 = vmatmul.mubr.f32.gmra.mxu0 %v94
    %v233 = vpop.f32.mrf.mxu0
    %v234 = vadd.f32 %v73, %v233
    %v235 = vpop.f32.mrf.mxu0
    %236 = vmatprep.mubr.f32.mxu0 0.0
    %237 = vmatmul.mubr.f32.gmra.mxu0 %v97
    %v238 = vpop.f32.mrf.mxu0
    %v239 = vadd.f32 %v78, %v238
    %v240 = vpop.f32.mrf.mxu0
    %241 = vdwg.mxu0
    %v242 = vmax.f32 %v214, 0.0
    %v243 = vmax.f32 %v219, 0.0
    %v244 = vmax.f32 %v224, 0.0
    %v245 = vmax.f32 %v229, 0.0
    %v246 = vmax.f32 %v234, 0.0
    %v247 = vmax.f32 %v239, 0.0
    %v248 = vld [vmem:[%s3] sm:$0x1]
    %s249 = sld [smem:[#allocation2]]
    %v250 = vstv %s249
    %vm251 = vcmask 392192
    %v253 = vsel %vm251, %v248, 0
    %255 = vmatprep.subr.mxu0 0.0
    %256 = vmatpush1.msra.mxu0 0.0
    %257 = vmatprep.subr.mxu0 0.0
    %258 = vmatpush1.msra.mxu0 0.0
    %259 = vmatprep.subr.mxu0 0.0
    %260 = vmatpush1.msra.mxu0 0.0
    %261 = vmatprep.subr.mxu0 0.0
    %262 = vmatpush1.msra.mxu0 0.0
    %263 = vmatprep.subr.mxu0 0.0
    %264 = vmatpush1.msra.mxu0 0.0
    %265 = vmatprep.subr.mxu0 0.0
    %266 = vmatpush1.msra.mxu0 0.0
    %267 = vmatprep.subr.mxu0 0.0
    %268 = vmatpush1.msra.mxu0 0.0
    %269 = vmatprep.subr.mxu0 0.0
    %270 = vmatpush1.msra.mxu0 0.0
    %271 = vmatprep.subr.mxu0 0.0
    %272 = vmatpush1.msra.mxu0 0.0
    %273 = vmatprep.subr.mxu0 0.0
    %274 = vmatpush1.msra.mxu0 0.0
    %275 = vmatprep.subr.mxu0 0.0
    %276 = vmatpush1.msra.mxu0 %v247
    %277 = vmatprep.subr.mxu0 0.0
    %278 = vmatpush1.msra.mxu0 %v246
    %279 = vmatprep.subr.mxu0 0.0
    %280 = vmatpush1.msra.mxu0 %v245
    %281 = vmatprep.subr.mxu0 0.0
    %282 = vmatpush1.msra.mxu0 %v244
    %283 = vmatprep.subr.mxu0 0.0
    %284 = vmatpush1.msra.mxu0 %v243
    %285 = vmatprep.subr.mxu0 0.0
    %286 = vmatpush1.msra.mxu0 %v242
    %287 = vmatprep.subr.mxu0 0.0
    %288 = vmatpush2.msra.mxu0 0.0
    %289 = vmatprep.subr.mxu0 0.0
    %290 = vmatpush2.msra.mxu0 0.0
    %291 = vmatprep.subr.mxu0 0.0
    %292 = vmatpush2.msra.mxu0 0.0
    %293 = vmatprep.subr.mxu0 0.0
    %294 = vmatpush2.msra.mxu0 0.0
    %295 = vmatprep.subr.mxu0 0.0
    %296 = vmatpush2.msra.mxu0 0.0
    %297 = vmatprep.subr.mxu0 0.0
    %298 = vmatpush2.msra.mxu0 0.0
    %299 = vmatprep.subr.mxu0 0.0
    %300 = vmatpush2.msra.mxu0 0.0
    %301 = vmatprep.subr.mxu0 0.0
    %302 = vmatpush2.msra.mxu0 0.0
    %303 = vmatprep.subr.mxu0 0.0
    %304 = vmatpush2.msra.mxu0 0.0
    %305 = vmatprep.subr.mxu0 0.0
    %306 = vmatpush2.msra.mxu0 0.0
    %307 = vmatprep.subr.mxu0 0.0
    %308 = vmatpush2.msra.mxu0 0.0
    %309 = vmatprep.subr.mxu0 0.0
    %310 = vmatpush2.msra.mxu0 0.0
    %311 = vmatprep.subr.mxu0 0.0
    %312 = vmatpush2.msra.mxu0 0.0
    %313 = vmatprep.subr.mxu0 0.0
    %314 = vmatpush2.msra.mxu0 0.0
    %315 = vmatprep.subr.mxu0 0.0
    %316 = vmatpush2.msra.mxu0 0.0
    %317 = vmatprep.subr.mxu0 0.0
    %318 = vmatpush2.msra.mxu0 0.0
    %319 = vmatprep.mubr.f32.mxu0 0.0
    %320 = vmatmul.mubr.f32.gmra.mxu0 %v253
    %v321 = vpop.f32.mrf.mxu0
    %v322 = vadd.f32 %v250, %v321
    %v323 = vpop.f32.mrf.mxu0
    %324 = vdwg.mxu0
    %v325 = vxor.u32 %v322, 2147483648
    %v326 = vmul.f32 %v325, 1.442695
    %v327 = vpow.pop %v326
    %v328 = vadd.f32 %v327, 1.0
    %v329 = vrcp.pop %v328
    %v330 = vmul.f32 1.0, %v329
    %331 = vst [vmem:[#allocation3] sm:$0x1] %v330
    // Predicated region
    $region22: #{tpu_custom_call.1} parent=1 // pred_check
      _
    $region23: #{tpu_custom_call.1} parent=1 // pred_check_branch
      %333 = sbr.rel (0) target = $region25
    $region24: #{tpu_custom_call.1} parent=1 // pred_region
      %s335 = ssub.s32 16, 16
      %336 = vsyncadd [#allocation4], %s335
      %s338 = sshll.u32 [#allocation3], 4
      %s339 = int_to_ptr.vmem [resolvable:$true] %s338
      %341 = dma.vmem_to_hbm [thread:$0]  %s339, 16, %s5, [#allocation4]
    $region25: #{tpu_custom_call.1} parent=1 // pred_fallthru
      _
    // Predicated region
    $region26: #{tpu_custom_call.1} parent=1 // pred_check
      _
    $region27: #{tpu_custom_call.1} parent=1 // pred_check_branch
      %343 = sbr.rel (0) target = $region29
    $region28: #{tpu_custom_call.1} parent=1 // pred_region
      %344 = dma.done [#allocation4], 16
    $region29: #{tpu_custom_call.1} parent=1 // pred_fallthru
      _
    %345 = vsyncpa [#allocation4], 1

</llo_original>
